<compile_context>
chip_gen: v5e
topology: v5e:2x2
jax: 0.10.0
libtpu: 0.0.40
codegen_flags: <defaults>
</compile_context>

<pallas_src>
import jax
import jax.numpy as jnp
from jax.experimental import pallas as pl
from jax.experimental.pallas import tpu as pltpu


def _cdiv(a: int, b: int) -> int:
    return -(-a // b)


def _round_up(x: int, m: int) -> int:
    return (x + m - 1) // m * m


def _make_fq_kernel(val_l: float, val_h: float):
    def fq_kernel(x_ref, params_ref, o_ref):
        x = x_ref[...].astype(jnp.float32)           # (tile_rows, tile_cols)
        params = params_ref[...]                     # (tile_rows, 2) f32: [min, log_scale]
        mn = params[:, 0:1]                          # (tile_rows, 1) -> row broadcast
        scale = jnp.exp(params[:, 1:2])              # exp(self.scale)
        s = val_h * pl.reciprocal(scale, approx=False)      # val_h * scale.reciprocal()
        inv_s = pl.reciprocal(s, approx=False)               # s.reciprocal()
        y = jnp.clip(x - mn, val_l, val_h)
        y = jnp.round(y * s)                         # half-to-even, same as torch.round
        o_ref[...] = (y * inv_s + mn).astype(o_ref.dtype)

    return fq_kernel


def _choose_tiles(rows, hw, itemsize, target_block_bytes, row_align, min_steps):
    # Columns (lane dim): use the full H*W extent if a minimal row tile fits the budget
    # (legal even when hw % 128 != 0 since it equals the array dim); otherwise a multiple
    # of 128 -> the boundary block is masked by Pallas.
    if row_align * hw * itemsize <= target_block_bytes:
        tile_cols = hw
    else:
        tile_cols = max(128, (target_block_bytes // (row_align * itemsize)) // 128 * 128)

    # Rows (sublane dim): full extent for tiny row counts, else the largest row_align
    # multiple keeping the block within budget.
    if rows <= row_align:
        tile_rows = rows
    else:
        max_rows = max(row_align,
                       (target_block_bytes // (tile_cols * itemsize)) // row_align * row_align)
        tile_rows = min(max_rows, _round_up(rows, row_align))

    # Guarantee enough grid steps to double-buffer and shard across TensorCores.
    def n_steps(tr, tc):
        return _cdiv(rows, tr) * _cdiv(hw, tc)

    while n_steps(tile_rows, tile_cols) < min_steps and tile_rows > row_align:
        tile_rows = max(row_align, _round_up(tile_rows // 2, row_align))
    while n_steps(tile_rows, tile_cols) < min_steps and tile_cols > 128:
        tile_cols = max(128, _round_up(tile_cols // 2, 128))
    return tile_rows, tile_cols


def fake_quantize(x_nchw, min_per_channel, log_scale_per_channel, levels=256,
                  target_block_bytes=4 << 20, io_dtype=None, min_grid_steps=8):
    """FakeQuantize forward.

    x_nchw:                 (N, C, H, W) activations (f32 or bf16)
    min_per_channel:        scalar or (C,)  -- self.min
    log_scale_per_channel:  scalar or (C,)  -- self.scale (log of range)
    io_dtype:               optional dtype for the pallas_call boundary (e.g. bf16 to
                            halve HBM traffic when the surrounding model is bf16).
    """
    N, C, H, W = x_nchw.shape
    val_h = float(levels - 1)
    val_l = 0.0

    if io_dtype is not None and x_nchw.dtype != jnp.dtype(io_dtype):
        x_nchw = x_nchw.astype(io_dtype)
    itemsize = jnp.dtype(x_nchw.dtype).itemsize

    rows, hw = N * C, H * W
    x2d = x_nchw.reshape(rows, hw)

    # Merged per-row params (col 0 = min, col 1 = log_scale); row r -> channel r % C.
    def per_row(v):
        v = jnp.ravel(jnp.asarray(v, jnp.float32))
        if v.size == 1:
            v = jnp.broadcast_to(v, (C,))
        return jnp.tile(v, (N,))

    params = jnp.stack([per_row(min_per_channel), per_row(log_scale_per_channel)], axis=-1)

    # NOTE: for very small H*W (< 128) the output stores are narrow/masked; regrouping
    # the layout to a wider lane dim would help there, but is only relevant in that regime.
    row_align = 16 if itemsize < 4 else 8            # sublane packing for narrow dtypes
    tile_rows, tile_cols = _choose_tiles(rows, hw, itemsize, target_block_bytes,
                                         row_align, min_grid_steps)
    grid = (_cdiv(rows, tile_rows), _cdiv(hw, tile_cols))

    block_bytes = tile_rows * tile_cols * itemsize
    # 2x(in) + 2x(out) double-buffered blocks + params + headroom; capped for v7x (64 MiB).
    vmem_limit_bytes = int(min(max(32 << 20, 4 * block_bytes + (8 << 20)), 56 << 20))

    out2d = pl.pallas_call(
        _make_fq_kernel(val_l, val_h),
        out_shape=jax.ShapeDtypeStruct((rows, hw), x2d.dtype),
        grid_spec=pl.GridSpec(
            grid=grid,
            in_specs=[
                pl.BlockSpec((tile_rows, tile_cols), lambda i, j: (i, j)),
                pl.BlockSpec((tile_rows, 2), lambda i, j: (i, 0)),
            ],
            out_specs=pl.BlockSpec((tile_rows, tile_cols), lambda i, j: (i, j)),
        ),
        compiler_params=pltpu.CompilerParams(
            dimension_semantics=("parallel", "parallel"),
            vmem_limit_bytes=vmem_limit_bytes,
        ),
    )(x2d, params)

    return out2d.reshape(N, C, H, W)


def fake_quantize_ref(x, mn, log_scale, levels=256):
    """Pure-JAX reference mirroring the PyTorch forward, for verification."""
    val_h = float(levels - 1)
    val_l = 0.0
    scale = jnp.exp(jnp.asarray(log_scale, jnp.float32)).reshape(1, -1, 1, 1)
    mn = jnp.asarray(mn, jnp.float32).reshape(1, -1, 1, 1)
    s = val_h * (1.0 / scale)
    y = jnp.clip(x - mn, val_l, val_h)
    y = jnp.round(y * s)
    return y * (1.0 / s) + mn


if __name__ == "__main__":
    key = jax.random.PRNGKey(0)
    N, C, H, W = 2, 4, 16, 16
    levels = 256

    x = jax.random.normal(key, (N, C, H, W), dtype=jnp.float32)

    # Deterministic synthetic FQ parameters (per-channel min / range):
    #   min = -1.0 - 0.1*c ; range = 2.0 + 0.2*c ; scale param = log(range)
    c_idx = jnp.arange(C, dtype=jnp.float32)
    min_val = -1.0 - 0.1 * c_idx
    ranges = 2.0 + 0.2 * c_idx
    log_scale = jnp.log(ranges)

    # --- f32 path (matches the PyTorch module's dtype) ---
    out = jax.block_until_ready(fake_quantize(x, min_val, log_scale, levels=levels))
    ref = fake_quantize_ref(x, min_val, log_scale, levels=levels)
    assert out.shape == x.shape and out.dtype == x.dtype

    # Robust check: near-exact everywhere; allow (rare) round-half ties to flip by at most
    # one quantization step due to exp ulp differences between kernel and XLA reference.
    step = (jnp.exp(log_scale) / float(levels - 1)).reshape(1, -1, 1, 1)
    diff = jnp.abs(out - ref)
    assert bool(jnp.all((diff <= 1e-5) | (diff <= step * 1.001))), "mismatch vs reference"
    assert float(jnp.mean((diff <= 1e-5).astype(jnp.float32))) > 0.99, "too many mismatches"

    # --- bf16-I/O path (halves HBM traffic when the surrounding model runs bf16) ---
    x_bf16 = x.astype(jnp.bfloat16)
    out_bf = jax.block_until_ready(fake_quantize(x_bf16, min_val, log_scale, levels=levels))
    assert out_bf.shape == x.shape and out_bf.dtype == jnp.bfloat16
    ref_bf = fake_quantize_ref(x_bf16.astype(jnp.float32), min_val, log_scale, levels=levels)
    assert bool(jnp.all(jnp.abs(out_bf.astype(jnp.float32) - ref_bf) <= 0.05)), "bf16 mismatch"

    print("KERNEL_OK")
</pallas_src>

<mosaic_0001>
module attributes {stable_mosaic.version = 11 : i64} {
  func.func @fq_kernel(%arg0: i32, %arg1: i32, %arg2: memref<8x128xf32, #tpu.memory_space<vmem>>, %arg3: memref<8x2xf32, #tpu.memory_space<vmem>>, %arg4: memref<8x128xf32, #tpu.memory_space<vmem>>) attributes {dimension_semantics = [#tpu.dimension_semantics<parallel>, #tpu.dimension_semantics<parallel>], iteration_bounds = array<i64: 1, 2>, scalar_prefetch = 0 : i64, scratch_operands = 0 : i64, tpu.core_type = #tpu.core_type<tc>, window_params = [{transform_indices = @transform_0, window_bounds = array<i64: 8, 128>}, {transform_indices = @transform_1, window_bounds = array<i64: 8, 2>}, {transform_indices = @transform_2, window_bounds = array<i64: 8, 128>}]} {
    %c0 = arith.constant 0 : index
    %c0_0 = arith.constant 0 : index
    %0 = vector.load %arg2[%c0, %c0_0] : memref<8x128xf32, #tpu.memory_space<vmem>>, vector<8x128xf32>
    %c0_1 = arith.constant 0 : index
    %c0_2 = arith.constant 0 : index
    %1 = vector.load %arg3[%c0_1, %c0_2] : memref<8x2xf32, #tpu.memory_space<vmem>>, vector<8x2xf32>
    %2 = vector.extract_strided_slice %1 {offsets = [0, 0], sizes = [8, 1], strides = [1, 1]} : vector<8x2xf32> to vector<8x1xf32>
    %3 = vector.extract_strided_slice %1 {offsets = [0, 1], sizes = [8, 1], strides = [1, 1]} : vector<8x2xf32> to vector<8x1xf32>
    %4 = math.exp %3 : vector<8x1xf32>
    %5 = tpu.reciprocal %4 : vector<8x1xf32> -> vector<8x1xf32>
    %cst = arith.constant 2.550000e+02 : f32
    %6 = vector.broadcast %cst : f32 to vector<8x1xf32>
    %7 = arith.mulf %6, %5 : vector<8x1xf32>
    %8 = tpu.reciprocal %7 : vector<8x1xf32> -> vector<8x1xf32>
    %9 = vector.broadcast %2 : vector<8x1xf32> to vector<8x128xf32>
    %10 = arith.subf %0, %9 : vector<8x128xf32>
    %cst_3 = arith.constant 0.000000e+00 : f32
    %cst_4 = arith.constant 2.550000e+02 : f32
    %11 = vector.broadcast %cst_3 : f32 to vector<8x128xf32>
    %12 = arith.maximumf %11, %10 : vector<8x128xf32>
    %13 = vector.broadcast %cst_4 : f32 to vector<8x128xf32>
    %14 = arith.minimumf %13, %12 : vector<8x128xf32>
    %15 = vector.broadcast %7 : vector<8x1xf32> to vector<8x128xf32>
    %16 = arith.mulf %14, %15 : vector<8x128xf32>
    %17 = math.roundeven %16 : vector<8x128xf32>
    %18 = vector.broadcast %8 : vector<8x1xf32> to vector<8x128xf32>
    %19 = arith.mulf %17, %18 : vector<8x128xf32>
    %20 = vector.broadcast %2 : vector<8x1xf32> to vector<8x128xf32>
    %21 = arith.addf %19, %20 : vector<8x128xf32>
    %c0_5 = arith.constant 0 : index
    %c0_6 = arith.constant 0 : index
    %22 = vector.load %arg4[%c0_5, %c0_6] : memref<8x128xf32, #tpu.memory_space<vmem>>, vector<8x128xf32>
    tpu.vector_store %arg4[%c0_5, %c0_6], %21 {strides = array<i32>} : memref<8x128xf32, #tpu.memory_space<vmem>>, vector<8x128xf32>,
    return
  }
  func.func @transform_0(%arg0: i32, %arg1: i32) -> (i32, i32) {
    %c0_i32 = arith.constant 0 : i32
    return %arg0, %arg1 : i32, i32
  }
  func.func @transform_1(%arg0: i32, %arg1: i32) -> (i32, i32) {
    %c0_i32 = arith.constant 0 : i32
    %c0_i32_0 = arith.constant 0 : i32
    return %arg0, %c0_i32 : i32, i32
  }
  func.func @transform_2(%arg0: i32, %arg1: i32) -> (i32, i32) {
    %c0_i32 = arith.constant 0 : i32
    return %arg0, %arg1 : i32, i32
  }
}

</mosaic_0001>

<llo_original>
// kernel: tpu_custom_call.1
$region0: #{tpu_custom_call.1}
  #allocation0 [shape = 'u32[]', space=smem, size = 0x4, offset = 0x4, fixed_abs, tag = 'smem constant byte address 0x4 - core index']
  #allocation1 [shape = 'u32[72,128]{1,0:T(1,128)}', space=vmem, size = 0x9000, scoped, tag = 'internal scratch']
  %s0 = inlined_call_operand.hbm [shape: f32[8,256], index: 0, kind: input, shape index: {}]
  %s1 = inlined_call_operand.vmem [shape: f32[8,2], index: 1, kind: input, shape index: {}]
  %s2 = inlined_call_operand.hbm [shape: f32[8,256], index: 2, kind: output, shape index: {}]
  %s3 = sld [smem:[#allocation0]]
  $region45: #{tpu_custom_call.1} parent=0
    _
  %s5 = ssub.s32 1, %s3
  %s6 = scalar_select 0, %s5, %s3
  $region1: #{tpu_custom_call.1} parent=0
    #allocation2 [shape = 'u8[8192]{0}', space=vmem, size = 0x2000, scoped, tag = 'input window, operand 0']
    #allocation3 [shape = 's32[2]{0}', space=sflag, size = 0x8, scoped, tag = 'scoped memory for tpu_custom_call.1']
    #allocation4 [shape = 's32[2]{0}', space=sflag, size = 0x8, scoped, tag = 'scoped memory for tpu_custom_call.1']
    #allocation5 [shape = 'u8[8192]{0}', space=vmem, size = 0x2000, scoped, tag = 'output window, operand 0']
    %7 = vsyncpa [#allocation3], 0
    %s8 = scalar_lea.sflag [#allocation3], 1
    %9 = vsyncpa %s8, 0
    %10 = vsyncpa [#allocation4], 0
    %s11 = scalar_lea.sflag [#allocation4], 1
    %12 = vsyncpa %s11, 0
    loop: start=0, step=1, limit=4
    $region2: #{tpu_custom_call.1} parent=1 // loop_pre_header
      _
    $region3: #{tpu_custom_call.1} parent=1 // loop_header
      %s14 = sphi 0, %s18
      %p15 = scmp.ge.s32.totalorder %s14, 4
      %s21 = sphi 0, %s33
      %s22 = sphi 0, %s29
      %s23 = sphi 0, %s21
      %s24 = sphi 0, %s22
      %s25 = sphi 0, %s23
      %s26 = sphi 0, %s24
      %s38 = sphi 0, %s40
      %s41 = sphi 0, %s38
      %s42 = sphi 0, %s41
      %s58 = sphi 0, %s42
      %s64 = sphi 0, %s66
      %s67 = sphi 0, %s64
      %s68 = sphi 0, %s67
      %s84 = sphi 0, %s68
      %s92 = sphi 0, %s94
      %s95 = sphi 0, %s92
      %s96 = sphi 0, %s95
      %s112 = sphi 0, %s96
    $region4: #{tpu_custom_call.1} parent=1 // loop_header_branch
      %17 = sbr.rel (%p15) target = $region8
    $region5: #{tpu_custom_call.1} parent=1 // loop_body
      %s19 = ssub.s32 %s14, 1
      %s20 = ssub.s32 %s14, 2
      %s27 = sadd.s32 1, %s22
      %p28 = scmp.ge.s32.totalorder %s27, 2
      %s29 = scalar_select %p28, 0, %s27
      %s30 = sadd.s32 1, %s21
      %s31 = scalar_select %p28, %s30, %s21
      %p32 = scmp.ge.s32.totalorder %s31, 1
      %s33 = scalar_select %p32, 0, %s31
      %s34 = ssub.s32 %s21, %s33
      %s35 = ssub.s32 %s22, %s29
      %s36 = sor.u32 %s34, %s35
      %p37 = scmp.eq.s32.totalorder %s36, 0
      %s39 = sadd.s32 %s38, 1
      %s40 = scalar_select %p37, %s38, %s39
      %p43 = pneg %p37
      %p44 = scmp.eq.s32.totalorder %s14, 1
      %p45 = por %p43, %p44
      %p46 = scmp.ne.s32.totalorder %s38, %s41
      %p47 = scmp.eq.s32.totalorder %s14, 0
      %p48 = por %p46, %p47
      %p49 = scmp.ne.s32.totalorder %s38, %s41
      %p50 = scmp.eq.s32.totalorder %s19, 1
      %p51 = por %p49, %p50
      %p52 = scmp.ne.s32.totalorder %s41, %s42
      %p53 = scmp.eq.s32.totalorder %s19, 0
      %p54 = por %p52, %p53
      %p55 = scmp.ne.s32.totalorder %s41, %s42
      %p56 = scmp.eq.s32.totalorder %s20, 1
      %p57 = por %p55, %p56
      %p59 = scmp.ne.s32.totalorder %s42, %s58
      %p60 = scmp.eq.s32.totalorder %s20, 0
      %p61 = por %p59, %p60
      %s62 = ssub.s32 %s21, %s33
      %p63 = scmp.eq.s32.totalorder %s62, 0
      %s65 = sadd.s32 %s64, 1
      %s66 = scalar_select %p63, %s64, %s65
      %p69 = pneg %p63
      %p70 = scmp.eq.s32.totalorder %s14, 1
      %p71 = por %p69, %p70
      %p72 = scmp.ne.s32.totalorder %s64, %s67
      %p73 = scmp.eq.s32.totalorder %s14, 0
      %p74 = por %p72, %p73
      %p75 = scmp.ne.s32.totalorder %s64, %s67
      %p76 = scmp.eq.s32.totalorder %s19, 1
      %p77 = por %p75, %p76
      %p78 = scmp.ne.s32.totalorder %s67, %s68
      %p79 = scmp.eq.s32.totalorder %s19, 0
      %p80 = por %p78, %p79
      %p81 = scmp.ne.s32.totalorder %s67, %s68
      %p82 = scmp.eq.s32.totalorder %s20, 1
      %p83 = por %p81, %p82
      %p85 = scmp.ne.s32.totalorder %s68, %s84
      %p86 = scmp.eq.s32.totalorder %s20, 0
      %p87 = por %p85, %p86
      %s88 = ssub.s32 %s21, %s33
      %s89 = ssub.s32 %s22, %s29
      %s90 = sor.u32 %s88, %s89
      %p91 = scmp.eq.s32.totalorder %s90, 0
      %s93 = sadd.s32 %s92, 1
      %s94 = scalar_select %p91, %s92, %s93
      %p97 = pneg %p91
      %p98 = scmp.eq.s32.totalorder %s14, 1
      %p99 = por %p97, %p98
      %p100 = scmp.ne.s32.totalorder %s92, %s95
      %p101 = scmp.eq.s32.totalorder %s14, 0
      %p102 = por %p100, %p101
      %p103 = scmp.ne.s32.totalorder %s92, %s95
      %p104 = scmp.eq.s32.totalorder %s19, 1
      %p105 = por %p103, %p104
      %p106 = scmp.ne.s32.totalorder %s95, %s96
      %p107 = scmp.eq.s32.totalorder %s19, 0
      %p108 = por %p106, %p107
      %p109 = scmp.ne.s32.totalorder %s95, %s96
      %p110 = scmp.eq.s32.totalorder %s20, 1
      %p111 = por %p109, %p110
      %p113 = scmp.ne.s32.totalorder %s96, %s112
      %p114 = scmp.eq.s32.totalorder %s20, 0
      %p115 = por %p113, %p114
      %p116 = scmp.le.s32.totalorder 1, %s14
      %p117 = scmp.lt.s32.totalorder %s14, 3
      %p118 = pnand %p116, %p117
      %p119 = pneg %p118
      // Predicated region
      $region9: #{tpu_custom_call.1} parent=5 // pred_check
        _
      $region10: #{tpu_custom_call.1} parent=5 // pred_check_branch
        %121 = sbr.rel (%p118) target = $region12
      $region11: #{tpu_custom_call.1} parent=5 // pred_region
        %s122 = ssub.s32 %s14, 1
        // Predicated region
        $region13: #{tpu_custom_call.1} parent=11 // pred_check
          %p123 = pneg %p80
        $region14: #{tpu_custom_call.1} parent=11 // pred_check_branch
          %125 = sbr.rel (%p123) target = $region16
        $region15: #{tpu_custom_call.1} parent=11 // pred_region
          %p126 = scmp.lt.s32.totalorder %s23, 0
          %s127 = scalar_select %p126, %s23, 0
          %s128 = smul.addr %s127, 8
          %s129 = scalar_lea.vmem %s1, %s128
        $region16: #{tpu_custom_call.1} parent=11 // pred_fallthru
          _
      $region12: #{tpu_custom_call.1} parent=5 // pred_fallthru
        _
      %p130 = scmp.lt.s32.totalorder %s14, 2
      // Predicated region
      $region17: #{tpu_custom_call.1} parent=5 // pred_check
        %p131 = pneg %p130
      $region18: #{tpu_custom_call.1} parent=5 // pred_check_branch
        %133 = sbr.rel (%p131) target = $region20
      $region19: #{tpu_custom_call.1} parent=5 // pred_region
        // Predicated region
        $region21: #{tpu_custom_call.1} parent=19 // pred_check
          %p134 = pneg %p48
        $region22: #{tpu_custom_call.1} parent=19 // pred_check_branch
          %136 = sbr.rel (%p134) target = $region24
        $region23: #{tpu_custom_call.1} parent=19 // pred_region
          %s137 = sand.u32 %s38, 1
          %s138 = scalar_lea.sflag [#allocation3], %s137
          %s139 = sand.u32 %s38, 1
          %s140 = smul.addr %s139, 8
          %s141 = scalar_lea.vmem [#allocation2], %s140
          %143 = vsyncadd %s138, 0
          %s144 = smul.addr %s21, 2
          %s145 = sadd.s32 %s22, %s144
          %s146 = smul.addr %s145, 8
          %s147 = scalar_lea.hbm %s0, %s146
          %s149 = sshll.u32 %s147, 4
          %s150 = int_to_ptr.hbm [resolvable:$true] %s149
          %s151 = sshll.u32 %s141, 4
          %s152 = int_to_ptr.vmem [resolvable:$true] %s151
          %154 = dma.hbm_to_vmem [thread:$0]  %s150, 128, %s152, %s138
        $region24: #{tpu_custom_call.1} parent=19 // pred_fallthru
          _
      $region20: #{tpu_custom_call.1} parent=5 // pred_fallthru
        _
      %p155 = scmp.le.s32.totalorder 1, %s14
      %p156 = scmp.lt.s32.totalorder %s14, 3
      %p157 = pnand %p155, %p156
      %p158 = pneg %p157
      // Predicated region
      $region25: #{tpu_custom_call.1} parent=5 // pred_check
        _
      $region26: #{tpu_custom_call.1} parent=5 // pred_check_branch
        %160 = sbr.rel (%p157) target = $region28
      $region27: #{tpu_custom_call.1} parent=5 // pred_region
        %s161 = ssub.s32 %s14, 1
        %s162 = sand.u32 %s41, 1
        %s163 = scalar_lea.sflag [#allocation3], %s162
        %s164 = sand.u32 %s41, 1
        %s165 = smul.addr %s164, 8
        %s166 = scalar_lea.vmem [#allocation2], %s165
        // Predicated region
        $region29: #{tpu_custom_call.1} parent=27 // pred_check
          %p167 = pneg %p54
        $region30: #{tpu_custom_call.1} parent=27 // pred_check_branch
          %169 = sbr.rel (%p167) target = $region32
        $region31: #{tpu_custom_call.1} parent=27 // pred_region
          %171 = dma.done %s163, 128
        $region32: #{tpu_custom_call.1} parent=27 // pred_fallthru
          _
        %s172 = sand.u32 %s41, 1
        %s173 = scalar_lea.sflag [#allocation3], %s172
        %s174 = sand.u32 %s41, 1
        %s175 = smul.addr %s174, 8
        %s176 = scalar_lea.vmem [#allocation2], %s175
        %p177 = pneg %p54
        %p178 = pneg %p51
        %p179 = scmp.lt.s32.totalorder %s23, 0
        %s180 = scalar_select %p179, %s23, 0
        %s181 = smul.addr %s180, 8
        %s182 = scalar_lea.vmem %s1, %s181
        %p183 = pneg %p80
        %p184 = pneg %p77
        %p185 = pneg %p108
        %p186 = pneg %p105
        %s187 = sand.u32 %s95, 1
        %s188 = scalar_lea.sflag [#allocation4], %s187
        %s189 = sand.u32 %s95, 1
        %s190 = smul.addr %s189, 8
        %s191 = scalar_lea.vmem [#allocation5], %s190
        %p192 = scmp.lt.s32.totalorder %s23, 0
        %s193 = scalar_select %p192, %s23, 0
        %s194 = smul.addr %s193, 8
        %s195 = scalar_lea.vmem %s1, %s194
        %v196 = vld [vmem:[%s166] sm:$0xff]
        %v197 = vld [vmem:[%s195] sm:$0xff]
        %v198 = vmul.f32 %v197, 1.442695
        %v199 = vpow.pop %v198
        %v200 = vrcp.pop %v199
        %v201 = vmul.f32 %v199, %v200
        %v202 = vsub.f32 1.0, %v201
        %v203 = vmul.f32 %v200, %v202
        %v204 = vadd.f32 %v200, %v203
        %vm205 = vweird.f32 %v199
        %vm206 = vweird.f32 %v200
        %vm207 = vmor %vm205, %vm206
        %v208 = vsel %vm207, %v200, %v204
        %v209 = vand.u32 2147483647, %v199
        %vm210 = vcmp.eq.f32.partialorder %v209, 8.507059e+37
        %v211 = vand.u32 %v199, 2147483648
        %v212 = vor.u32 1.1754944e-38, %v211
        %v213 = vsel %vm210, %v212, %v208
        %v214 = vmul.f32 %v213, 255.0
        %v215 = vrcp.pop %v214
        %v216 = vmul.f32 %v214, %v215
        %v217 = vsub.f32 1.0, %v216
        %v218 = vmul.f32 %v215, %v217
        %v219 = vadd.f32 %v215, %v218
        %vm220 = vweird.f32 %v214
        %vm221 = vweird.f32 %v215
        %vm222 = vmor %vm220, %vm221
        %v223 = vsel %vm222, %v215, %v219
        %v224 = vand.u32 2147483647, %v214
        %vm225 = vcmp.eq.f32.partialorder %v224, 8.507059e+37
        %v226 = vand.u32 %v214, 2147483648
        %v227 = vor.u32 1.1754944e-38, %v226
        %v228 = vsel %vm225, %v227, %v223
        %230 = vset.pattern.permute.xlu0 0
        %231 = vperm.xlu0 %230, %v197
        %v232 = vpop.permute.xlu0 %231
        %v234 = vsub.f32 %v196, %v232
        %v235 = vmax.f32 %v234, 0.0
        %v236 = vmin.f32 %v235, 255.0
        %238 = vset.pattern.permute.xlu0 1
        %239 = vperm.xlu0 %238, %v214
        %v240 = vpop.permute.xlu0 %239
        %v242 = vmul.f32 %v236, %v240
        %v243 = vround.ne.pseudo %v242
        %245 = vset.pattern.permute.xlu0 1
        %246 = vperm.xlu0 %245, %v228
        %v247 = vpop.permute.xlu0 %246
        %v249 = vmul.f32 %v243, %v247
        %v250 = vadd.f32 %v249, %v232
        %251 = vst [vmem:[%s191] sm:$0xff] %v250
        %s252 = sand.u32 %s95, 1
        %s253 = scalar_lea.sflag [#allocation4], %s252
        %s254 = sand.u32 %s95, 1
        %s255 = smul.addr %s254, 8
        %s256 = scalar_lea.vmem [#allocation5], %s255
        // Predicated region
        $region33: #{tpu_custom_call.1} parent=27 // pred_check
          %p257 = pneg %p105
        $region34: #{tpu_custom_call.1} parent=27 // pred_check_branch
          %259 = sbr.rel (%p257) target = $region36
        $region35: #{tpu_custom_call.1} parent=27 // pred_region
          %261 = vsyncadd %s253, 0
          %s262 = smul.addr %s23, 2
          %s263 = sadd.s32 %s24, %s262
          %s264 = smul.addr %s263, 8
          %s265 = scalar_lea.hbm %s2, %s264
          %s267 = sshll.u32 %s256, 4
          %s268 = int_to_ptr.vmem [resolvable:$true] %s267
          %s269 = sshll.u32 %s265, 4
          %s270 = int_to_ptr.hbm [resolvable:$true] %s269
          %272 = dma.vmem_to_hbm [thread:$0]  %s268, 128, %s270, %s253
        $region36: #{tpu_custom_call.1} parent=27 // pred_fallthru
          _
      $region28: #{tpu_custom_call.1} parent=5 // pred_fallthru
        _
      %p273 = scmp.le.s32.totalorder 2, %s14
      // Predicated region
      $region37: #{tpu_custom_call.1} parent=5 // pred_check
        %p274 = pneg %p273
      $region38: #{tpu_custom_call.1} parent=5 // pred_check_branch
        %276 = sbr.rel (%p274) target = $region40
      $region39: #{tpu_custom_call.1} parent=5 // pred_region
        %s277 = ssub.s32 %s14, 2
        // Predicated region
        $region41: #{tpu_custom_call.1} parent=39 // pred_check
          %p278 = pneg %p111
        $region42: #{tpu_custom_call.1} parent=39 // pred_check_branch
          %280 = sbr.rel (%p278) target = $region44
        $region43: #{tpu_custom_call.1} parent=39 // pred_region
          %s281 = sand.u32 %s96, 1
          %s282 = scalar_lea.sflag [#allocation4], %s281
          %s283 = sand.u32 %s96, 1
          %s284 = smul.addr %s283, 8
          %s285 = scalar_lea.vmem [#allocation5], %s284
          %287 = dma.done %s282, 128
        $region44: #{tpu_custom_call.1} parent=39 // pred_fallthru
          _
      $region40: #{tpu_custom_call.1} parent=5 // pred_fallthru
        _
    $region6: #{tpu_custom_call.1} parent=1 // loop_footer
      %s18 = sadd.s32 1, %s14
    $region7: #{tpu_custom_call.1} parent=1 // loop_footer_branch
      %13 = sbr.rel target = $region3
    $region8: #{tpu_custom_call.1} parent=1 // loop_exit
      _
    %288 = vsyncpa [#allocation3], 1
    %s289 = scalar_lea.sflag [#allocation3], 1
    %290 = vsyncpa %s289, 1
    %291 = vsyncpa [#allocation4], 1
    %s292 = scalar_lea.sflag [#allocation4], 1
    %293 = vsyncpa %s292, 1

</llo_original>
